<compile_context>
chip_gen: v5e
topology: v5e:2x2
jax: 0.10.0
libtpu: 0.0.40
codegen_flags: <defaults>
</compile_context>

<pallas_src>
import jax
import jax.numpy as jnp
from jax import lax
from jax.experimental import pallas as pl
from jax.experimental.pallas import tpu as pltpu

_LANE = 128      # vreg lane width (last-dim tiling unit)
_SUBLANE = 8     # fp32 sublane width (second-to-last tiling unit)

# Minimum second-to-last tile multiple per element size (fp32 / bf16 / 8-bit).
_SUBLANE_FOR_BYTES = {8: _SUBLANE, 4: _SUBLANE, 2: 2 * _SUBLANE, 1: 4 * _SUBLANE}


def _round_up(x: int, m: int) -> int:
    return (x + m - 1) // m * m


def _pad2d(a: jax.Array, rows: int, cols: int) -> jax.Array:
    pr, pc = rows - a.shape[0], cols - a.shape[1]
    if pr == 0 and pc == 0:
        return a
    return jnp.pad(a, ((0, pr), (0, pc)))


def _largest_tile(total_p: int, cap: int, unit: int = _LANE) -> int:
    """Largest multiple of `unit` that divides `total_p` (a unit multiple) and
    is <= cap (falls back to `unit` if nothing smaller fits)."""
    q = total_p // unit
    best, d = 1, 1
    while d * d <= q:
        if q % d == 0:
            for c in (d, q // d):
                if c * unit <= cap:
                    best = max(best, c)
        d += 1
    return best * unit


def _resolve_compute_dtype(requested, in_dtype):
    in_dtype = jnp.dtype(in_dtype)
    if isinstance(requested, str) and requested == "auto":
        # HBM-bound op: bf16 operands for fp32 inputs (fp32 accumulation kept,
        # output dtype unchanged). Halves both X and W streams; also avoids
        # v5e's multi-pass fp32 MXU emulation.
        return jnp.dtype(jnp.bfloat16) if in_dtype == jnp.float32 else in_dtype
    if requested is None:
        return in_dtype
    return jnp.dtype(requested)


# ---------------------------------------------------------------------------
# Generation-aware VMEM ceiling (review item: no hard 64 MiB clamp).
# ---------------------------------------------------------------------------
_VMEM_CEILING = None


def _vmem_ceiling_bytes() -> int:
    """Usable VMEM ceiling with headroom for Mosaic internal scratch:
    ~102 MiB on v5e/v6e (128 MiB physical), ~48 MiB on v7x (64 MiB physical)."""
    global _VMEM_CEILING
    if _VMEM_CEILING is None:
        cap = None
        try:
            cap = getattr(pltpu.get_tpu_info(), "vmem_capacity_bytes", None)
        except Exception:
            cap = None
        if cap:
            ceiling = int(min(cap * 4 // 5, cap - (16 << 20)))
        else:
            ceiling = 48 << 20      # conservative (v7x-sized) fallback
        _VMEM_CEILING = max(ceiling, 32 << 20)
    return _VMEM_CEILING


# ---------------------------------------------------------------------------
# Feature probe: is pipeline_mode=pl.Buffered(1) supported by this jax/Mosaic?
# ---------------------------------------------------------------------------
_BUFFERED1_OK = None


def _copy_probe_kernel(x_ref, o_ref):
    o_ref[...] = x_ref[...]


def _buffered1_supported() -> bool:
    global _BUFFERED1_OK
    if _BUFFERED1_OK is None:
        try:
            fn = pl.pallas_call(
                _copy_probe_kernel,
                out_shape=jax.ShapeDtypeStruct((_SUBLANE, _LANE), jnp.float32),
                grid=(1,),
                in_specs=[pl.BlockSpec((_SUBLANE, _LANE), lambda i: (0, 0),
                                       pipeline_mode=pl.Buffered(1))],
                out_specs=pl.BlockSpec((_SUBLANE, _LANE), lambda i: (0, 0)),
            )
            jax.block_until_ready(fn(jnp.zeros((_SUBLANE, _LANE), jnp.float32)))
            _BUFFERED1_OK = True
        except Exception:
            _BUFFERED1_OK = False
    return _BUFFERED1_OK


def _block_spec(shape, index_map, single_buffer: bool) -> pl.BlockSpec:
    if single_buffer:
        # Resident tile (block index constant across the whole grid): a single
        # buffer suffices, freeing the second buffer's VMEM for larger tiles.
        return pl.BlockSpec(shape, index_map, pipeline_mode=pl.Buffered(1))
    return pl.BlockSpec(shape, index_map)


# ---------------------------------------------------------------------------
# Tile selection: tn divides padded n_out, tk divides padded n_in, all
# double-buffered tiles (+ fp32 accumulator when K is tiled) fit the budget.
# ---------------------------------------------------------------------------
def _choose_tiles(batch, n_in_p, n_out_p, tm_req, tn_cap, tk_cap,
                  cdt_bytes, out_bytes, budget):
    sub = max(_SUBLANE_FOR_BYTES.get(cdt_bytes, _SUBLANE),
              _SUBLANE_FOR_BYTES.get(out_bytes, _SUBLANE))
    tm = max(sub, min(_round_up(tm_req, sub), _round_up(batch, sub)))

    tn_hi = n_out_p if tn_cap is None else min(
        n_out_p, max(_LANE, _round_up(tn_cap, _LANE)))
    tk_hi = n_in_p if tk_cap is None else min(
        n_in_p, max(_LANE, _round_up(tk_cap, _LANE)))
    # v6e/v7x MXUs are 2x256^2: prefer >=256-wide output tiles when they divide
    # the padded n_out (v5e's 128-wide MXU is unaffected).
    tn_floor = 256 if (n_out_p % 256 == 0 and tn_hi >= 256) else _LANE

    def need(tm_, tn_, tk_):
        acc = tm_ * tn_ * 4 if tk_ < n_in_p else 0           # fp32 accumulator
        return (2 * tm_ * tk_ * cdt_bytes                    # x, double-buffered
                + 2 * tn_ * tk_ * cdt_bytes                  # w, worst-case 2 bufs
                + 2 * tm_ * tn_ * out_bytes                  # out, double-buffered
                + acc)

    while True:
        # Contraction tile: as large as the budget allows (K axis only appears
        # when n_in is genuinely too big for a single VMEM-resident slab).
        tk = _largest_tile(n_in_p, tk_hi)
        while tk > _LANE and need(tm, _LANE, tk) > budget:
            tk = _largest_tile(n_in_p, tk - _LANE)
        # Out-feature tile: largest divisor tile fitting what is left.
        rem = budget - 2 * tm * tk * cdt_bytes
        denom = (2 * tk * cdt_bytes + 2 * tm * out_bytes
                 + (4 * tm if tk < n_in_p else 0))
        tn_bound = max(_LANE, rem // denom) if rem > 0 else _LANE
        if tn_floor > _LANE and tn_bound < tn_floor and need(tm, tn_floor, tk) <= budget:
            tn_bound = tn_floor
        tn = _largest_tile(n_out_p, min(tn_hi, tn_bound))
        if need(tm, tn, tk) <= budget:
            return tm, tn, tk
        if tm <= sub:
            return sub, _LANE, _LANE       # last resort: minimal tiles
        tm = max(sub, (tm // 2) // sub * sub)


# ---------------------------------------------------------------------------
# Kernels
# ---------------------------------------------------------------------------
def _msiica_kernel(x_ref, w_ref, s_ref):
    # x_ref: (tm, tk) row tile of Xw; w_ref: (tn, tk) row tile of W (== column
    # tile of W.T; no host-side transpose). Contract the feature axes directly
    # on the MXU with fp32 accumulation regardless of operand dtype.
    s_ref[...] = lax.dot_general(
        x_ref[...], w_ref[...],
        dimension_numbers=(((1,), (1,)), ((), ())),
        preferred_element_type=jnp.float32,
    ).astype(s_ref.dtype)


def _msiica_kernel_acc(x_ref, w_ref, s_ref, acc_ref):
    # K-tiled variant: grid is (row tiles, out tiles, K tiles), K innermost.
    @pl.when(pl.program_id(2) == 0)
    def _init():
        acc_ref[...] = jnp.zeros_like(acc_ref)

    acc_ref[...] += lax.dot_general(
        x_ref[...], w_ref[...],
        dimension_numbers=(((1,), (1,)), ((), ())),
        preferred_element_type=jnp.float32,
    )

    @pl.when(pl.program_id(2) == pl.num_programs(2) - 1)
    def _finalize():
        s_ref[...] = acc_ref[...].astype(s_ref.dtype)


# ---------------------------------------------------------------------------
# Forward wrapper
# ---------------------------------------------------------------------------
def msiica_forward(xw, w, *, tm=512, tn=None, tk=None, compute_dtype="auto",
                   n_out=None):
    """S = Xw @ W.T  (== nn.Linear(n_in, n_out, bias=False) with orthogonal W).

    xw: (batch, n_in).
    w:  raw (n_out, n_in) weight, or a weight already padded to
        (round_up(n_out,128), round_up(n_in,128)) -- e.g. prepared once by the
        MSIICA wrapper (pass `n_out` in that case).
    tm: requested row tile (clipped to the padded batch and the VMEM budget).
    tn / tk: optional caps (128-multiples) on the out-feature / contraction tiles.
    compute_dtype: "auto" (default) uses bf16 operands for fp32 inputs; fp32
        accumulation and output dtype are preserved. Pass jnp.float32 or None
        to opt out. NOTE: v7x's MXU has no integer path -- a quantized variant
        would have to use fp8, not int8.
    """
    batch, n_in = xw.shape
    n_in_p = _round_up(n_in, _LANE)
    w_rows, w_cols = w.shape
    if w_cols not in (n_in, n_in_p):
        raise ValueError(f"weight/in-feature mismatch: {w_cols} vs {n_in}")
    if n_out is None:
        n_out = w_rows
    n_out_p = _round_up(n_out, _LANE)
    if w_rows not in (n_out, n_out_p):
        raise ValueError(f"weight/out-feature mismatch: {w_rows} vs {n_out}")

    out_dtype = jnp.dtype(xw.dtype)
    cdt = _resolve_compute_dtype(compute_dtype, out_dtype)
    cdt_bytes, out_bytes = cdt.itemsize, out_dtype.itemsize

    ceiling = _vmem_ceiling_bytes()
    budget = ceiling - (4 << 20)            # headroom for Mosaic internal scratch
    tm_e, tn_e, tk_e = _choose_tiles(batch, n_in_p, n_out_p, tm, tn, tk,
                                     cdt_bytes, out_bytes, budget)
    batch_p = _round_up(batch, tm_e)
    i_tiles = batch_p // tm_e
    j_tiles = n_out_p // tn_e
    k_tiles = n_in_p // tk_e

    # Pad / cast. Both are skipped when they are no-ops; W should be prepared
    # once via the MSIICA wrapper, and under a caller-side jit the Xw cast
    # fuses with its producer rather than adding a standalone HBM pass.
    xp = _pad2d(xw, batch_p, n_in_p)
    if xp.dtype != cdt:
        xp = xp.astype(cdt)
    wp = _pad2d(w, n_out_p, n_in_p)
    if wp.dtype != cdt:
        wp = wp.astype(cdt)

    vmem_need = (2 * tm_e * tk_e * cdt_bytes + 2 * tn_e * tk_e * cdt_bytes
                 + 2 * tm_e * tn_e * out_bytes
                 + (tm_e * tn_e * 4 if k_tiles > 1 else 0))
    vmem_limit = int(min(ceiling, max(32 << 20, vmem_need + (4 << 20))))

    cost = pl.CostEstimate(
        flops=2 * batch_p * n_in_p * n_out_p,
        transcendentals=0,
        bytes_accessed=((batch_p + n_out_p) * n_in_p * cdt_bytes
                        + batch_p * n_out_p * out_bytes))

    use_b1 = _buffered1_supported()
    x_const = (i_tiles == 1 and k_tiles == 1)
    w_const = (j_tiles == 1 and k_tiles == 1)

    def build(allow_single_buffer):
        if k_tiles == 1:
            grid = (i_tiles, j_tiles)
            in_specs = [
                _block_spec((tm_e, tk_e), lambda i, j: (i, 0),
                            allow_single_buffer and x_const),
                _block_spec((tn_e, tk_e), lambda i, j: (j, 0),
                            allow_single_buffer and w_const),
            ]
            out_specs = pl.BlockSpec((tm_e, tn_e), lambda i, j: (i, j))
            scratch = ()
            kernel = _msiica_kernel
            # Row axis leads: on v7x's two TensorCores the megacore split lands
            # on the long, independent batch axis, keeping W resident per core.
            sem = ("parallel", "parallel")
        else:
            grid = (i_tiles, j_tiles, k_tiles)
            in_specs = [
                pl.BlockSpec((tm_e, tk_e), lambda i, j, k: (i, k)),
                pl.BlockSpec((tn_e, tk_e), lambda i, j, k: (j, k)),
            ]
            out_specs = pl.BlockSpec((tm_e, tn_e), lambda i, j, k: (i, j))
            scratch = (pltpu.VMEM((tm_e, tn_e), jnp.float32),)
            kernel = _msiica_kernel_acc
            sem = ("parallel", "parallel", "arbitrary")
        return pl.pallas_call(
            kernel,
            out_shape=jax.ShapeDtypeStruct((batch_p, n_out_p), out_dtype),
            grid_spec=pltpu.PrefetchScalarGridSpec(
                num_scalar_prefetch=0, grid=grid,
                in_specs=in_specs, out_specs=out_specs,
                scratch_shapes=scratch),
            compiler_params=pltpu.CompilerParams(
                dimension_semantics=sem, vmem_limit_bytes=vmem_limit),
            cost_estimate=cost,
        )

    try:
        s_padded = build(use_b1)(xp, wp)
    except Exception:
        if not use_b1:
            raise
        s_padded = build(False)(xp, wp)   # retry with default double buffering

    if (batch_p, n_out_p) != (batch, n_out):
        s_padded = s_padded[:batch, :n_out]
    return s_padded


class MSIICA:
    """Pallas counterpart of the PyTorch module: forward(Xw) = Xw @ W.T.

    The (constant) weight is padded/cast exactly once at construction, so the
    per-call path only touches the activations (review item: hoist W prep)."""

    def __init__(self, n_in, n_out, U=None, ortho=True, *, key=None,
                 compute_dtype="auto", tm=512, tn=None, tk=None):
        # TODO(synk): geotorch.orthogonal's training-time re-parametrization
        # (projection back onto the Stiefel manifold) has no Pallas equivalent;
        # the weight is taken as given (U) or generated host-side via QR.
        if U is None:
            U = make_orthogonal_weight(
                key if key is not None else jax.random.PRNGKey(0), n_out, n_in)
        U = jnp.asarray(U)
        if U.shape != (n_out, n_in):
            raise ValueError(f"U must have shape {(n_out, n_in)}, got {U.shape}")
        self.n_in, self.n_out = n_in, n_out
        self._tm, self._tn, self._tk = tm, tn, tk
        self._compute_dtype = compute_dtype
        self._w_raw = U
        self._w_prepared = {}                 # compute dtype -> padded+cast W

    def _weight_for(self, cdt):
        wp = self._w_prepared.get(cdt)
        if wp is None:
            wp = _pad2d(self._w_raw, _round_up(self.n_out, _LANE),
                        _round_up(self.n_in, _LANE))
            if wp.dtype != cdt:
                wp = wp.astype(cdt)
            self._w_prepared[cdt] = wp
        return wp

    def __call__(self, xw):
        cdt = _resolve_compute_dtype(self._compute_dtype, xw.dtype)
        return msiica_forward(xw, self._weight_for(cdt), n_out=self.n_out,
                              tm=self._tm, tn=self._tn, tk=self._tk,
                              compute_dtype=cdt)


def make_orthogonal_weight(key, n_out: int, n_in: int) -> jax.Array:
    """Deterministic orthogonal weight, mimicking geotorch.orthogonal's manifold."""
    n = max(n_out, n_in)
    a = jax.random.normal(key, (n, n), dtype=jnp.float32)
    q, r = jnp.linalg.qr(a)
    q = q * jnp.sign(jnp.diag(r))[None, :]   # sign-fix for a deterministic Q
    return q[:n_out, :n_in]


if __name__ == "__main__":
    key = jax.random.PRNGKey(0)
    k_x, k_w, k_x2, k_w2, k_x3, k_w3 = jax.random.split(key, 6)

    # Shapes consistent with the module: Xw (batch, n_in), W (n_out, n_in).
    batch, n_in, n_out = 16, 32, 32
    xw = jax.random.normal(k_x, (batch, n_in), dtype=jnp.float32)
    w = make_orthogonal_weight(k_w, n_out, n_in)
    s_ref = xw @ w.T

    # 1) Exact fp32-operand path.
    s_fp32 = jax.block_until_ready(msiica_forward(xw, w, compute_dtype=jnp.float32))
    assert s_fp32.shape == (batch, n_out)
    assert jnp.allclose(s_fp32, s_ref, atol=1e-5, rtol=1e-5), "fp32 mismatch"

    # 2) Default path: bf16 operands, fp32 MXU accumulation (HBM-bound regime).
    s_auto = jax.block_until_ready(msiica_forward(xw, w))
    assert s_auto.dtype == xw.dtype
    assert jnp.allclose(s_auto, s_ref, atol=5e-2, rtol=5e-2), "bf16 path mismatch"

    # 3) Module-style wrapper: weight padded/cast once, reused per call.
    model = MSIICA(n_in, n_out, U=w)
    s_mod = jax.block_until_ready(model(xw))
    assert jnp.allclose(s_mod, s_ref, atol=5e-2, rtol=5e-2), "module path mismatch"

    # 4) Ragged shape: exercises lane/sublane padding of batch / n_in / n_out.
    b2, i2, o2 = 40, 70, 50
    xw2 = jax.random.normal(k_x2, (b2, i2), dtype=jnp.float32)
    w2 = make_orthogonal_weight(k_w2, o2, i2)
    s2 = jax.block_until_ready(msiica_forward(xw2, w2, compute_dtype=jnp.float32))
    assert s2.shape == (b2, o2)
    assert jnp.allclose(s2, xw2 @ w2.T, atol=1e-5, rtol=1e-5), "padded-case mismatch"

    # 5) Small tn/tk caps force the K-tiled accumulator kernel (multi j and k).
    b3, i3, o3 = 24, 256, 384
    xw3 = jax.random.normal(k_x3, (b3, i3), dtype=jnp.float32)
    w3 = make_orthogonal_weight(k_w3, o3, i3)
    s3 = jax.block_until_ready(
        msiica_forward(xw3, w3, compute_dtype=jnp.float32, tn=128, tk=128))
    assert s3.shape == (b3, o3)
    assert jnp.allclose(s3, xw3 @ w3.T, atol=2e-3, rtol=2e-3), "K-tiled mismatch"

    print("KERNEL_OK")
</pallas_src>

<mosaic_0001>
module attributes {stable_mosaic.version = 11 : i64} {
  func.func @_copy_probe_kernel(%arg0: i32, %arg1: memref<8x128xf32, #tpu.memory_space<vmem>>, %arg2: memref<8x128xf32, #tpu.memory_space<vmem>>) attributes {dimension_semantics = [#tpu.dimension_semantics<arbitrary>], iteration_bounds = array<i64: 1>, scalar_prefetch = 0 : i64, scratch_operands = 0 : i64, tpu.core_type = #tpu.core_type<tc>, window_params = [{pipeline_mode = #tpu.pipeline_mode<synchronous>, transform_indices = @transform_0, window_bounds = array<i64: 8, 128>}, {pipeline_mode = #tpu.pipeline_mode<synchronous>, transform_indices = @transform_1, window_bounds = array<i64: 8, 128>}]} {
    %c0 = arith.constant 0 : index
    %c0_0 = arith.constant 0 : index
    %0 = vector.load %arg1[%c0, %c0_0] : memref<8x128xf32, #tpu.memory_space<vmem>>, vector<8x128xf32>
    %c0_1 = arith.constant 0 : index
    %c0_2 = arith.constant 0 : index
    %1 = vector.load %arg2[%c0_1, %c0_2] : memref<8x128xf32, #tpu.memory_space<vmem>>, vector<8x128xf32>
    tpu.vector_store %arg2[%c0_1, %c0_2], %0 {strides = array<i32>} : memref<8x128xf32, #tpu.memory_space<vmem>>, vector<8x128xf32>,
    return
  }
  func.func @transform_0(%arg0: i32) -> (i32, i32) {
    %c0_i32 = arith.constant 0 : i32
    %c0_i32_0 = arith.constant 0 : i32
    %c0_i32_1 = arith.constant 0 : i32
    return %c0_i32, %c0_i32_0 : i32, i32
  }
  func.func @transform_1(%arg0: i32) -> (i32, i32) {
    %c0_i32 = arith.constant 0 : i32
    %c0_i32_0 = arith.constant 0 : i32
    %c0_i32_1 = arith.constant 0 : i32
    return %c0_i32, %c0_i32_0 : i32, i32
  }
}

module attributes {stable_mosaic.version = 11 : i64} {
  func.func @_msiica_kernel(%arg0: i32, %arg1: i32, %arg2: memref<16x128xf32, #tpu.memory_space<vmem>>, %arg3: memref<128x128xf32, #tpu.memory_space<vmem>>, %arg4: memref<16x128xf32, #tpu.memory_space<vmem>>) attributes {dimension_semantics = [#tpu.dimension_semantics<parallel>, #tpu.dimension_semantics<parallel>], iteration_bounds = array<i64: 1, 1>, scalar_prefetch = 0 : i64, scratch_operands = 0 : i64, tpu.core_type = #tpu.core_type<tc>, window_params = [{transform_indices = @transform_0, window_bounds = array<i64: 16, 128>}, {transform_indices = @transform_1, window_bounds = array<i64: 128, 128>}, {transform_indices = @transform_2, window_bounds = array<i64: 16, 128>}]} {
    %c0 = arith.constant 0 : index
    %c0_0 = arith.constant 0 : index
    %0 = vector.load %arg2[%c0, %c0_0] : memref<16x128xf32, #tpu.memory_space<vmem>>, vector<16x128xf32>
    %c0_1 = arith.constant 0 : index
    %c0_2 = arith.constant 0 : index
    %1 = vector.load %arg3[%c0_1, %c0_2] : memref<128x128xf32, #tpu.memory_space<vmem>>, vector<128x128xf32>
    %cst = arith.constant dense<0.000000e+00> : vector<16x128xf32>
    %2 = tpu.matmul %0, %1, %cst {dimension_numbers = #tpu.dot_dimension_numbers<[1], [1], [0], [0], [0, 0, 1, 0], [], []>} : vector<16x128xf32>, vector<128x128xf32>, vector<16x128xf32> -> vector<16x128xf32>
    %c0_3 = arith.constant 0 : index
    %c0_4 = arith.constant 0 : index
    %3 = vector.load %arg4[%c0_3, %c0_4] : memref<16x128xf32, #tpu.memory_space<vmem>>, vector<16x128xf32>
    tpu.vector_store %arg4[%c0_3, %c0_4], %2 {strides = array<i32>} : memref<16x128xf32, #tpu.memory_space<vmem>>, vector<16x128xf32>,
    return
  }
  func.func @transform_0(%arg0: i32, %arg1: i32) -> (i32, i32) {
    %c0_i32 = arith.constant 0 : i32
    %c0_i32_0 = arith.constant 0 : i32
    return %arg0, %c0_i32 : i32, i32
  }
  func.func @transform_1(%arg0: i32, %arg1: i32) -> (i32, i32) {
    %c0_i32 = arith.constant 0 : i32
    %c0_i32_0 = arith.constant 0 : i32
    return %arg1, %c0_i32 : i32, i32
  }
  func.func @transform_2(%arg0: i32, %arg1: i32) -> (i32, i32) {
    %c0_i32 = arith.constant 0 : i32
    return %arg0, %arg1 : i32, i32
  }
}

</mosaic_0001>

<llo_original>
// kernel: tpu_custom_call.1
$region0: #{tpu_custom_call.1}
  #allocation0 [shape = 'u32[]', space=smem, size = 0x4, offset = 0x4, fixed_abs, tag = 'smem constant byte address 0x4 - core index']
  #allocation1 [shape = 'u32[72,128]{1,0:T(1,128)}', space=vmem, size = 0x9000, scoped, tag = 'internal scratch']
  %s0 = inlined_call_operand.hbm [shape: f32[8,128], index: 0, kind: input, shape index: {}]
  %s1 = inlined_call_operand.hbm [shape: f32[8,128], index: 1, kind: output, shape index: {}]
  %s2 = sld [smem:[#allocation0]]
  $region18: #{tpu_custom_call.1} parent=0
    _
  %s4 = ssub.s32 1, %s2
  %s5 = scalar_select 0, %s4, %s2
  $region1: #{tpu_custom_call.1} parent=0
    #allocation2 [shape = 'u8[4096]{0}', space=vmem, size = 0x1000, scoped, tag = 'input window, operand 0, single buffered']
    #allocation3 [shape = 's32[1]{0}', space=sflag, size = 0x4, scoped, tag = 'scoped memory for tpu_custom_call.1']
    #allocation4 [shape = 's32[1]{0}', space=sflag, size = 0x4, scoped, tag = 'scoped memory for tpu_custom_call.1']
    #allocation5 [shape = 'u8[4096]{0}', space=vmem, size = 0x1000, scoped, tag = 'output window, operand 0, single buffered']
    %6 = vsyncpa [#allocation3], 0
    %7 = vsyncpa [#allocation4], 0
    // Predicated region
    $region2: #{tpu_custom_call.1} parent=1 // pred_check
      _
    $region3: #{tpu_custom_call.1} parent=1 // pred_check_branch
      %9 = sbr.rel (0) target = $region5
    $region4: #{tpu_custom_call.1} parent=1 // pred_region
      %11 = vsyncadd [#allocation3], 0
      %s13 = sshll.u32 %s0, 4
      %s14 = int_to_ptr.hbm [resolvable:$true] %s13
      %s15 = sshll.u32 [#allocation2], 4
      %s16 = int_to_ptr.vmem [resolvable:$true] %s15
      %18 = dma.hbm_to_vmem [thread:$0]  %s14, 128, %s16, [#allocation3]
    $region5: #{tpu_custom_call.1} parent=1 // pred_fallthru
      _
    // Predicated region
    $region6: #{tpu_custom_call.1} parent=1 // pred_check
      _
    $region7: #{tpu_custom_call.1} parent=1 // pred_check_branch
      %20 = sbr.rel (0) target = $region9
    $region8: #{tpu_custom_call.1} parent=1 // pred_region
      %22 = dma.done [#allocation3], 128
    $region9: #{tpu_custom_call.1} parent=1 // pred_fallthru
      _
    %v23 = vld [vmem:[#allocation2] sm:$0xff]
    %24 = vst [vmem:[#allocation5] sm:$0xff] %v23
    // Predicated region
    $region10: #{tpu_custom_call.1} parent=1 // pred_check
      _
    $region11: #{tpu_custom_call.1} parent=1 // pred_check_branch
      %26 = sbr.rel (0) target = $region13
    $region12: #{tpu_custom_call.1} parent=1 // pred_region
      %28 = vsyncadd [#allocation4], 0
      %s30 = sshll.u32 [#allocation5], 4
      %s31 = int_to_ptr.vmem [resolvable:$true] %s30
      %s32 = sshll.u32 %s1, 4
      %s33 = int_to_ptr.hbm [resolvable:$true] %s32
      %35 = dma.vmem_to_hbm [thread:$0]  %s31, 128, %s33, [#allocation4]
    $region13: #{tpu_custom_call.1} parent=1 // pred_fallthru
      _
    // Predicated region
    $region14: #{tpu_custom_call.1} parent=1 // pred_check
      _
    $region15: #{tpu_custom_call.1} parent=1 // pred_check_branch
      %37 = sbr.rel (0) target = $region17
    $region16: #{tpu_custom_call.1} parent=1 // pred_region
      %39 = dma.done [#allocation4], 128
    $region17: #{tpu_custom_call.1} parent=1 // pred_fallthru
      _
    %40 = vsyncpa [#allocation3], 1
    %41 = vsyncpa [#allocation4], 1

// kernel: tpu_custom_call.1
$region0: #{tpu_custom_call.1}
  #allocation0 [shape = 'u32[]', space=smem, size = 0x4, offset = 0x4, fixed_abs, tag = 'smem constant byte address 0x4 - core index']
  #allocation1 [shape = 'u32[72,128]{1,0:T(1,128)}', space=vmem, size = 0x9000, scoped, tag = 'internal scratch']
  %s0 = inlined_call_operand.hbm [shape: f32[16,128], index: 0, kind: input, shape index: {}]
  %s1 = inlined_call_operand.hbm [shape: f32[128,128], index: 1, kind: input, shape index: {}]
  %s2 = inlined_call_operand.hbm [shape: f32[16,128], index: 2, kind: output, shape index: {}]
  %s3 = sld [smem:[#allocation0]]
  $region26: #{tpu_custom_call.1} parent=0
    _
  %s5 = ssub.s32 1, %s3
  %s6 = scalar_select 0, %s5, %s3
  $region1: #{tpu_custom_call.1} parent=0
    #allocation2 [shape = 'u8[8192]{0}', space=vmem, size = 0x2000, scoped, tag = 'input window, operand 0, single buffered']
    #allocation3 [shape = 's32[1]{0}', space=sflag, size = 0x4, scoped, tag = 'scoped memory for tpu_custom_call.1']
    #allocation4 [shape = 's32[1]{0}', space=sflag, size = 0x4, scoped, tag = 'scoped memory for tpu_custom_call.1']
    #allocation5 [shape = 'u8[65536]{0}', space=vmem, size = 0x10000, scoped, tag = 'input window, operand 1, single buffered']
    #allocation6 [shape = 's32[1]{0}', space=sflag, size = 0x4, scoped, tag = 'scoped memory for tpu_custom_call.1']
    #allocation7 [shape = 'u8[8192]{0}', space=vmem, size = 0x2000, scoped, tag = 'output window, operand 0, single buffered']
    %7 = vsyncpa [#allocation3], 0
    %8 = vsyncpa [#allocation6], 0
    %9 = vsyncpa [#allocation4], 0
    // Predicated region
    $region2: #{tpu_custom_call.1} parent=1 // pred_check
      _
    $region3: #{tpu_custom_call.1} parent=1 // pred_check_branch
      %11 = sbr.rel (0) target = $region5
    $region4: #{tpu_custom_call.1} parent=1 // pred_region
      %13 = vsyncadd [#allocation3], 0
      %s14 = sshll.u32 %s0, 4
      %s15 = int_to_ptr.hbm [resolvable:$true] %s14
      %s16 = sshll.u32 [#allocation2], 4
      %s17 = int_to_ptr.vmem [resolvable:$true] %s16
      %22 = dma.hbm_to_vmem [thread:$0]  %s15, 256, %s17, [#allocation3], 128, 128, 8
    $region5: #{tpu_custom_call.1} parent=1 // pred_fallthru
      _
    // Predicated region
    $region6: #{tpu_custom_call.1} parent=1 // pred_check
      _
    $region7: #{tpu_custom_call.1} parent=1 // pred_check_branch
      %24 = sbr.rel (0) target = $region9
    $region8: #{tpu_custom_call.1} parent=1 // pred_region
      %26 = vsyncadd [#allocation6], 0
      %s27 = sshll.u32 %s1, 4
      %s28 = int_to_ptr.hbm [resolvable:$true] %s27
      %s29 = sshll.u32 [#allocation5], 4
      %s30 = int_to_ptr.vmem [resolvable:$true] %s29
      %35 = dma.hbm_to_vmem [thread:$0]  %s28, 2048, %s30, [#allocation6], 128, 128, 8
    $region9: #{tpu_custom_call.1} parent=1 // pred_fallthru
      _
    // Predicated region
    $region10: #{tpu_custom_call.1} parent=1 // pred_check
      _
    $region11: #{tpu_custom_call.1} parent=1 // pred_check_branch
      %37 = sbr.rel (0) target = $region13
    $region12: #{tpu_custom_call.1} parent=1 // pred_region
      %39 = dma.done [#allocation3], 256
    $region13: #{tpu_custom_call.1} parent=1 // pred_fallthru
      _
    // Predicated region
    $region14: #{tpu_custom_call.1} parent=1 // pred_check
      _
    $region15: #{tpu_custom_call.1} parent=1 // pred_check_branch
      %41 = sbr.rel (0) target = $region17
    $region16: #{tpu_custom_call.1} parent=1 // pred_region
      %43 = dma.done [#allocation6], 2048
    $region17: #{tpu_custom_call.1} parent=1 // pred_fallthru
      _
    %v44 = vld [vmem:[#allocation2] sm:$0xff]
    %v45 = vld [vmem:[#allocation2 + $0x8] sm:$0xff]
    %v46 = vld [vmem:[#allocation5] sm:$0xff]
    %v47 = vld [vmem:[#allocation5 + $0x8] sm:$0xff]
    %v48 = vld [vmem:[#allocation5 + $0x10] sm:$0xff]
    %v49 = vld [vmem:[#allocation5 + $0x18] sm:$0xff]
    %v50 = vld [vmem:[#allocation5 + $0x20] sm:$0xff]
    %v51 = vld [vmem:[#allocation5 + $0x28] sm:$0xff]
    %v52 = vld [vmem:[#allocation5 + $0x30] sm:$0xff]
    %v53 = vld [vmem:[#allocation5 + $0x38] sm:$0xff]
    %v54 = vld [vmem:[#allocation5 + $0x40] sm:$0xff]
    %v55 = vld [vmem:[#allocation5 + $0x48] sm:$0xff]
    %v56 = vld [vmem:[#allocation5 + $0x50] sm:$0xff]
    %v57 = vld [vmem:[#allocation5 + $0x58] sm:$0xff]
    %v58 = vld [vmem:[#allocation5 + $0x60] sm:$0xff]
    %v59 = vld [vmem:[#allocation5 + $0x68] sm:$0xff]
    %v60 = vld [vmem:[#allocation5 + $0x70] sm:$0xff]
    %v61 = vld [vmem:[#allocation5 + $0x78] sm:$0xff]
    %62 = vmatpush.xpose.msra.mxu0 %v61
    %63 = vmatpush.xpose.msra.mxu0 %v60
    %64 = vmatpush.xpose.msra.mxu0 %v59
    %65 = vmatpush.xpose.msra.mxu0 %v58
    %66 = vmatpush.xpose.msra.mxu0 %v57
    %67 = vmatpush.xpose.msra.mxu0 %v56
    %68 = vmatpush.xpose.msra.mxu0 %v55
    %69 = vmatpush.xpose.msra.mxu0 %v54
    %70 = vmatpush.xpose.msra.mxu0 %v53
    %71 = vmatpush.xpose.msra.mxu0 %v52
    %72 = vmatpush.xpose.msra.mxu0 %v51
    %73 = vmatpush.xpose.msra.mxu0 %v50
    %74 = vmatpush.xpose.msra.mxu0 %v49
    %75 = vmatpush.xpose.msra.mxu0 %v48
    %76 = vmatpush.xpose.msra.mxu0 %v47
    %77 = vmatpush.xpose.msra.mxu0 %v46
    %78 = vmatmul.f32.gmra.mxu0 %v44
    %v79 = vpop.f32.mrf.mxu0
    %v80 = vadd.f32 0.0, %v79
    %81 = vmatmul.f32.gmra.mxu0 %v45
    %v82 = vpop.f32.mrf.mxu0
    %v83 = vadd.f32 0.0, %v82
    %84 = vdwg.mxu0
    %85 = vst [vmem:[#allocation7] sm:$0xff] %v80
    %86 = vst [vmem:[#allocation7 + $0x8] sm:$0xff] %v83
    // Predicated region
    $region18: #{tpu_custom_call.1} parent=1 // pred_check
      _
    $region19: #{tpu_custom_call.1} parent=1 // pred_check_branch
      %88 = sbr.rel (0) target = $region21
    $region20: #{tpu_custom_call.1} parent=1 // pred_region
      %90 = vsyncadd [#allocation4], 0
      %s91 = sshll.u32 [#allocation7], 4
      %s92 = int_to_ptr.vmem [resolvable:$true] %s91
      %s93 = sshll.u32 %s2, 4
      %s94 = int_to_ptr.hbm [resolvable:$true] %s93
      %99 = dma.vmem_to_hbm [thread:$0]  %s92, 256, %s94, [#allocation4], 128, 128, 8
    $region21: #{tpu_custom_call.1} parent=1 // pred_fallthru
      _
    // Predicated region
    $region22: #{tpu_custom_call.1} parent=1 // pred_check
      _
    $region23: #{tpu_custom_call.1} parent=1 // pred_check_branch
      %101 = sbr.rel (0) target = $region25
    $region24: #{tpu_custom_call.1} parent=1 // pred_region
      %103 = dma.done [#allocation4], 256
    $region25: #{tpu_custom_call.1} parent=1 // pred_fallthru
      _
    %104 = vsyncpa [#allocation3], 1
    %105 = vsyncpa [#allocation6], 1
    %106 = vsyncpa [#allocation4], 1

</llo_original>
